<compile_context>
chip_gen: v5e
topology: v5e:2x2
jax: 0.10.0
libtpu: 0.0.40
codegen_flags: <defaults>
</compile_context>

<pallas_src>
import functools

import numpy as np
import jax
import jax.numpy as jnp
from jax import lax
from jax.experimental import pallas as pl
from jax.experimental.pallas import tpu as pltpu

try:  # prefer scipy's C implementation for the host-side assignment
    from scipy.optimize import linear_sum_assignment as _scipy_lsa
except Exception:  # pragma: no cover
    _scipy_lsa = None


# ----------------------------------------------------------------------------
# Host-side linear sum assignment (numpy-vectorized Jonker-Volgenant, minimize)
# TODO(synk): sequential Hungarian matching has no clean Pallas equivalent; the
# reference also runs it on CPU (`.cpu()` + scipy), so it stays on host here.
# ----------------------------------------------------------------------------
def _linear_sum_assignment_np(cost):
    cost = np.asarray(cost, dtype=np.float64)
    transposed = False
    if cost.shape[0] > cost.shape[1]:
        cost = cost.T
        transposed = True
    n, m = cost.shape  # n <= m
    u = np.zeros(n + 1)
    v = np.zeros(m + 1)
    p = np.zeros(m + 1, dtype=np.int64)
    way = np.zeros(m + 1, dtype=np.int64)
    for i in range(1, n + 1):
        p[0] = i
        j0 = 0
        minv = np.full(m + 1, np.inf)
        used = np.zeros(m + 1, dtype=bool)
        while True:
            used[j0] = True
            i0 = p[j0]
            free = ~used[1:]
            cur = cost[i0 - 1, :] - u[i0] - v[1:]
            minv1 = minv[1:]     # views: writes go through to minv / way
            way1 = way[1:]
            upd = free & (cur < minv1)
            minv1[upd] = cur[upd]
            way1[upd] = j0
            masked = np.where(free, minv1, np.inf)
            j1 = int(np.argmin(masked)) + 1
            delta = masked[j1 - 1]
            used_idx = np.nonzero(used)[0]
            u[p[used_idx]] += delta
            v[used_idx] -= delta
            minv[~used] -= delta
            j0 = j1
            if p[j0] == 0:
                break
        while True:
            j1 = way[j0]
            p[j0] = p[j1]
            j0 = j1
            if j0 == 0:
                break
    rows, cols = [], []
    for j in range(1, m + 1):
        if p[j] != 0:
            rows.append(p[j] - 1)
            cols.append(j - 1)
    rows = np.asarray(rows, dtype=np.int64)
    cols = np.asarray(cols, dtype=np.int64)
    if transposed:
        rows, cols = cols, rows
    order = np.argsort(rows)
    return rows[order], cols[order]


def _assign(cost):
    if _scipy_lsa is not None:
        r, c = _scipy_lsa(np.asarray(cost))
        return np.asarray(r, np.int64), np.asarray(c, np.int64)
    return _linear_sum_assignment_np(cost)


# ----------------------------------------------------------------------------
# small helpers
# ----------------------------------------------------------------------------
def _round_up(x, m):
    return ((x + m - 1) // m) * m


def _vmem_capacity_bytes():
    try:
        cap = int(pltpu.get_tpu_info().vmem_capacity_bytes)
        if cap > 0:
            return cap
    except Exception:
        pass
    return 64 << 20  # conservative fallback (v7x per-TensorCore VMEM)


def _vmem_budget():
    """Returns (per-grid-step block budget incl. double-buffering & temps,
    explicit scoped-VMEM limit to pass to the compiler).

    128 MiB chips (v5e/v6e): 24 MiB budget / 40 MiB limit.
    64 MiB chips (v7x):      16 MiB budget / 32 MiB limit."""
    cap = _vmem_capacity_bytes()
    budget = min(cap // 4, 24 << 20)
    limit = int(min(cap // 2, budget + (16 << 20)))
    return budget, limit


def _pick_bblk(batch, per_batch_bytes, budget):
    """Largest batch block whose per-step working set fits `budget` (no divisor
    constraint; grid uses cdiv), capped so the batch grid has >=2 steps and both
    v7x TensorCores get work on the "parallel" axis."""
    bblk = max(1, min(batch, budget // max(per_batch_bytes, 1)))
    if batch >= 2:
        bblk = min(bblk, (batch + 1) // 2)
    return int(bblk)


def _row_tile_and_bucket(total_rows, d, budget=8 << 20):
    """Fixed (padded row bucket, row tile) for the matched-loss kernels.
    Depends only on static shapes, so the padded size is stable across steps
    (one compile per shape, not per match count)."""
    rows8 = _round_up(max(int(total_rows), 1), 8)
    tm = 8
    for cand in (512, 256, 128, 64, 32, 16, 8):
        if cand <= rows8 and 3 * cand * d * 4 <= budget:
            tm = cand
            break
    mp = _round_up(rows8, tm)
    return mp, tm


# ----------------------------------------------------------------------------
# Pallas kernels
# ----------------------------------------------------------------------------
def _ls_nll_cost_kernel(preds_ref, tgt_ref, cost_ref):
    """nll[b, i, j] = -log_softmax(preds[b, i])[tgt[b, j]].

    preds_ref: (Bblk, N, D)    model dtype (cast in-kernel)
    tgt_ref:   (Bblk, Npad, 1) i32; padded columns hold -1 (all-zero one-hot)
    cost_ref:  (Bblk, N, Npad) f32, lane-dense (Npad = roundup(N, 128)); padded
               columns hold the finite value lse[i] and are stripped on device.
    """
    x = preds_ref[...]
    x32 = x.astype(jnp.float32)
    m = jnp.max(x32, axis=-1, keepdims=True)
    lse = jnp.log(jnp.sum(jnp.exp(x32 - m), axis=-1, keepdims=True)) + m  # (B,N,1)

    t = tgt_ref[...]                                                       # (B,Npad,1)
    d_iota = lax.broadcasted_iota(jnp.int32, t.shape[:2] + (x.shape[-1],), 2)
    onehot = t == d_iota                                                   # bool mask once
    # gather-as-matmul on the MXU: g[b,i,j] = preds[b, i, tgt[b, j]]
    # (cast operands only here to keep bf16/f32 copies' live ranges short)
    g = jnp.einsum("bnd,bjd->bnj", x.astype(jnp.bfloat16),
                   onehot.astype(jnp.bfloat16),
                   preferred_element_type=jnp.float32)                     # (B,N,Npad)
    cost_ref[...] = lse - g


def _mse_row_cost_kernel(preds_ref, tgt_ref, cost_ref):
    # Reference quirk (reproduced): for 3-D targets the repeat pattern pairs
    # preds[b, i] with targets[b, i] for every column j, so the pairwise cost
    # is constant along j.  Only the per-row MSE is computed/stored; the
    # (B, N, N) broadcast is a host-side numpy view.
    # TODO(synk): a lane-dense (B, 1, N) output needs an in-kernel sublane->tile
    # relayout of the reduced row; kept (B, N, 1) since the store is only B*N floats.
    p = preds_ref[...].astype(jnp.float32)
    t = tgt_ref[...].astype(jnp.float32)
    cost_ref[...] = jnp.mean((p - t) ** 2, axis=-1, keepdims=True)


def _ls_ce_mean_kernel(epsilon, nvalid_ref, preds_ref, tgt_ref, out_ref,
                       smooth_acc, nll_acc):
    """LabelSmoothingCrossEntropy(epsilon, reduction='mean') over the first
    n_valid rows (runtime SMEM scalar); padded rows masked via global row iota.
    Row-tiled grid with (1,1) VMEM accumulators (reduction axis = "arbitrary")."""
    step = pl.program_id(0)
    tm = preds_ref.shape[0]

    @pl.when(step == 0)
    def _():
        smooth_acc[...] = jnp.zeros_like(smooth_acc)
        nll_acc[...] = jnp.zeros_like(nll_acc)

    x = preds_ref[...].astype(jnp.float32)                                 # (tm, D)
    m = jnp.max(x, axis=-1, keepdims=True)
    lsm = (x - m) - jnp.log(jnp.sum(jnp.exp(x - m), axis=-1, keepdims=True))

    n_valid = nvalid_ref[0]
    row = lax.broadcasted_iota(jnp.int32, (tm, 1), 0) + step * tm
    valid = row < n_valid                                                  # (tm,1) bool

    t = tgt_ref[...]                                                       # (tm,1) i32
    d_iota = lax.broadcasted_iota(jnp.int32, lsm.shape, 1)
    picked = jnp.where(t == d_iota, lsm, 0.0)                              # select, no cast/mul pass

    smooth_rows = jnp.where(valid, -jnp.sum(lsm, axis=-1, keepdims=True), 0.0)
    nll_rows = jnp.where(valid, -jnp.sum(picked, axis=-1, keepdims=True), 0.0)
    smooth_acc[...] += jnp.sum(smooth_rows, keepdims=True)
    nll_acc[...] += jnp.sum(nll_rows, keepdims=True)

    @pl.when(step == pl.num_programs(0) - 1)
    def _():
        inv = 1.0 / n_valid.astype(jnp.float32)
        n_cls = float(x.shape[-1])
        out_ref[...] = (epsilon * smooth_acc[...] * inv / n_cls
                        + (1.0 - epsilon) * nll_acc[...] * inv)


def _mse_mean_kernel(nvalid_ref, preds_ref, tgt_ref, out_ref, acc):
    """nn.MSELoss(reduction='mean') over the first n_valid rows (runtime scalar)."""
    step = pl.program_id(0)
    tm = preds_ref.shape[0]

    @pl.when(step == 0)
    def _():
        acc[...] = jnp.zeros_like(acc)

    p = preds_ref[...].astype(jnp.float32)
    t = tgt_ref[...].astype(jnp.float32)
    row = lax.broadcasted_iota(jnp.int32, (tm, 1), 0) + step * tm
    valid = row < nvalid_ref[0]
    sq = jnp.where(valid, jnp.sum((p - t) ** 2, axis=-1, keepdims=True), 0.0)
    acc[...] += jnp.sum(sq, keepdims=True)

    @pl.when(step == pl.num_programs(0) - 1)
    def _():
        cnt = nvalid_ref[0].astype(jnp.float32)
        out_ref[...] = acc[...] / (cnt * float(p.shape[-1]))


# ----------------------------------------------------------------------------
# cached pallas_call builders (one compile per static shape/dtype/config)
# ----------------------------------------------------------------------------
@functools.lru_cache(maxsize=None)
def _build_ls_nll_cost(B, N, D, dtype_name):
    npad = _round_up(N, 128)
    in_bytes = jnp.dtype(dtype_name).itemsize
    budget, vmem_limit = _vmem_budget()
    per_b = (2 * (N * D * in_bytes + npad * 4 + N * npad * 4)   # double-buffered IO blocks
             + N * D * (4 + 2)                                  # f32 + bf16 copies of x
             + npad * D * 2                                     # bf16 one-hot
             + N * npad * 4)                                    # f32 einsum result
    bblk = _pick_bblk(B, per_b, budget)

    call = pl.pallas_call(
        _ls_nll_cost_kernel,
        grid=(pl.cdiv(B, bblk),),
        in_specs=[pl.BlockSpec((bblk, N, D), lambda b: (b, 0, 0)),
                  pl.BlockSpec((bblk, npad, 1), lambda b: (b, 0, 0))],
        out_specs=pl.BlockSpec((bblk, N, npad), lambda b: (b, 0, 0)),
        out_shape=jax.ShapeDtypeStruct((B, N, npad), jnp.float32),
        compiler_params=pltpu.CompilerParams(
            dimension_semantics=("parallel",),        # batches independent (v7x 2 TCs)
            vmem_limit_bytes=vmem_limit),
    )

    def f(preds, targets_i32):
        tgt_pad = jnp.full((B, npad, 1), -1, jnp.int32).at[:, :N, 0].set(targets_i32)
        cost = call(preds, tgt_pad)
        return cost[:, :, :N]        # strip lane padding on device before host transfer

    return jax.jit(f)


@functools.lru_cache(maxsize=None)
def _build_mse_row_cost(B, N, D, p_dtype, t_dtype):
    pbytes = jnp.dtype(p_dtype).itemsize
    tbytes = jnp.dtype(t_dtype).itemsize
    budget, vmem_limit = _vmem_budget()
    per_b = 2 * (N * D * (pbytes + tbytes) + N * 4) + 2 * N * D * 4
    bblk = _pick_bblk(B, per_b, budget)

    call = pl.pallas_call(
        _mse_row_cost_kernel,
        grid=(pl.cdiv(B, bblk),),
        in_specs=[pl.BlockSpec((bblk, N, D), lambda b: (b, 0, 0)),
                  pl.BlockSpec((bblk, N, D), lambda b: (b, 0, 0))],
        out_specs=pl.BlockSpec((bblk, N, 1), lambda b: (b, 0, 0)),
        out_shape=jax.ShapeDtypeStruct((B, N, 1), jnp.float32),
        compiler_params=pltpu.CompilerParams(
            dimension_semantics=("parallel",),
            vmem_limit_bytes=vmem_limit),
    )
    return jax.jit(call)


@functools.lru_cache(maxsize=None)
def _build_ls_ce_mean(mp, d, tm, epsilon):
    # TODO(synk): folding the matched-row gather in via PrefetchScalarGridSpec +
    # pl.Element row index_map (and fusing CE+MSE into one call) would remove the
    # remaining XLA gathers; kept separate for DMA granularity / simplicity.
    return jax.jit(pl.pallas_call(
        functools.partial(_ls_ce_mean_kernel, float(epsilon)),
        grid_spec=pltpu.PrefetchScalarGridSpec(
            num_scalar_prefetch=1,                    # n_valid lives in SMEM at runtime
            grid=(mp // tm,),
            in_specs=[pl.BlockSpec((tm, d), lambda i, nv: (i, 0)),
                      pl.BlockSpec((tm, 1), lambda i, nv: (i, 0))],
            out_specs=pl.BlockSpec((1, 1), lambda i, nv: (0, 0)),
            scratch_shapes=[pltpu.VMEM((1, 1), jnp.float32),
                            pltpu.VMEM((1, 1), jnp.float32)]),
        out_shape=jax.ShapeDtypeStruct((1, 1), jnp.float32),
        compiler_params=pltpu.CompilerParams(
            dimension_semantics=("arbitrary",)),
    ))


@functools.lru_cache(maxsize=None)
def _build_mse_mean(mp, d, tm):
    return jax.jit(pl.pallas_call(
        _mse_mean_kernel,
        grid_spec=pltpu.PrefetchScalarGridSpec(
            num_scalar_prefetch=1,
            grid=(mp // tm,),
            in_specs=[pl.BlockSpec((tm, d), lambda i, nv: (i, 0)),
                      pl.BlockSpec((tm, d), lambda i, nv: (i, 0))],
            out_specs=pl.BlockSpec((1, 1), lambda i, nv: (0, 0)),
            scratch_shapes=[pltpu.VMEM((1, 1), jnp.float32)]),
        out_shape=jax.ShapeDtypeStruct((1, 1), jnp.float32),
        compiler_params=pltpu.CompilerParams(
            dimension_semantics=("arbitrary",)),
    ))


# ----------------------------------------------------------------------------
# device-function wrappers
# ----------------------------------------------------------------------------
def label_smoothing_ce_mean(preds, targets, n_valid, epsilon, row_tile):
    """preds (Mp, D) logits in model dtype, targets (Mp, 1) i32; first n_valid rows real."""
    mp, d = preds.shape
    f = _build_ls_ce_mean(mp, d, row_tile, float(epsilon))
    return f(jnp.asarray([n_valid], jnp.int32), preds, targets)[0, 0]


def mse_mean(preds, targets, n_valid, row_tile):
    mp, d = preds.shape
    f = _build_mse_mean(mp, d, row_tile)
    return f(jnp.asarray([n_valid], jnp.int32), preds, targets)[0, 0]


# host adapters: normalize kernel output to a host numpy (B, N, N) cost matrix
def _ls_cost_host(preds, targets):
    """Raw pairwise NLL cost.  The reference matcher cost is `eps*const +
    (1-eps)*nll`; that positive affine transform cannot change the Hungarian
    assignment, so the global label-smoothing term is dropped on this path."""
    B, N, D = preds.shape
    tgt = targets if targets.dtype == jnp.int32 else targets.astype(jnp.int32)
    f = _build_ls_nll_cost(B, N, D, jnp.dtype(preds.dtype).name)
    return np.asarray(jax.device_get(f(preds, tgt)))


def _mse_cost_host(preds, targets):
    B, N, D = preds.shape
    f = _build_mse_row_cost(B, N, D, jnp.dtype(preds.dtype).name,
                            jnp.dtype(targets.dtype).name)
    r = np.asarray(jax.device_get(f(preds, targets)))[:, :, 0]
    return np.broadcast_to(r[:, :, None], (B, N, N))   # constant along j (view)


def _pad_matched_indices(idx_b, idx_n, mp):
    """Pad host index arrays to the fixed bucket `mp` by repeating the last index;
    padded rows are masked out inside the loss kernels via the runtime n_valid."""
    m = int(len(idx_b))
    fb = int(idx_b[-1]) if m else 0
    fn = int(idx_n[-1]) if m else 0
    ib = np.full(mp, fb, np.int32)
    ip = np.full(mp, fn, np.int32)
    if m:
        ib[:m] = np.asarray(idx_b, np.int32)
        ip[:m] = np.asarray(idx_n, np.int32)
    return jnp.asarray(ib), jnp.asarray(ip), m


# ----------------------------------------------------------------------------
# Module re-implementations
# ----------------------------------------------------------------------------
def data_extract(model_out, label, has_element, has_feat):
    ele_preds = ele_targets = feat_preds = feat_targets = cls_label = None
    if has_element and has_feat:
        ele_preds, feat_preds = model_out
        ele_targets, feat_targets, masks, cls_label = label
    elif has_feat:
        feat_preds = model_out
        feat_targets, masks, cls_label = label
    else:
        ele_preds = model_out
        ele_targets, masks, cls_label = label
    return ele_preds, ele_targets, feat_preds, feat_targets, masks, cls_label


class Matcher:
    """Hungarian matcher; cost matrix from a Pallas kernel, assignment on host."""

    def __init__(self, cost_fn):
        self.cost_fn = cost_fn  # (preds, targets) -> host np.ndarray (B, N, N)

    def __call__(self, preds, targets, masks=None):
        batch = preds.shape[0]
        cost = self.cost_fn(preds, targets)
        masks_np = None
        if masks is not None:
            masks_np = np.asarray(jax.device_get(masks)).astype(bool)
        idx_b_p, idx_p, idx_b_t, idx_t = [], [], [], []
        for b in range(batch):
            c = cost[b]
            m = None if masks_np is None else masks_np[b]
            if m is not None:
                midx = np.where(m)[0]
                c = c[:, midx]
            rows, cols = _assign(c)
            if m is not None:
                cols = midx[cols]
            idx_b_p.append(np.full(len(rows), b, dtype=np.int64))
            idx_p.append(rows)
            idx_b_t.append(np.full(len(cols), b, dtype=np.int64))
            idx_t.append(cols)
        index_preds = (np.concatenate(idx_b_p), np.concatenate(idx_p))
        index_targets = (np.concatenate(idx_b_t), np.concatenate(idx_t))
        return index_preds, index_targets


class Loss:
    def __init__(self, has_element=True, has_feat=False, mu=0.5, epsilon=0.1):
        assert has_element or has_feat
        self.has_element = has_element
        self.has_feat = has_feat
        self.mu = mu
        self.epsilon = epsilon
        self.matcher = Matcher(_ls_cost_host if has_element else _mse_cost_host)

    def _element_loss(self, preds, targets, ib, ip, jb, jt):
        B, N, D = preds.shape
        mp, tm = _row_tile_and_bucket(B * N, D)
        ibp, ipp, m = _pad_matched_indices(ib, ip, mp)
        jbp, jtp, _ = _pad_matched_indices(jb, jt, mp)
        if m == 0:                       # all targets masked out -> no matches
            return jnp.float32(0.0)
        p = preds[ibp, ipp]                                       # (Mp, D) gather
        t = targets[jbp, jtp].astype(jnp.int32).reshape(-1, 1)    # (Mp, 1)
        return label_smoothing_ce_mean(p, t, m, self.epsilon, tm)

    def _feat_loss(self, preds, targets, ib, ip, jb, jt):
        B, N, D = preds.shape
        mp, tm = _row_tile_and_bucket(B * N, D)
        ibp, ipp, m = _pad_matched_indices(ib, ip, mp)
        jbp, jtp, _ = _pad_matched_indices(jb, jt, mp)
        if m == 0:
            return jnp.float32(0.0)
        return mse_mean(preds[ibp, ipp], targets[jbp, jtp], m, tm)

    def __call__(self, model_out, label):
        (ele_preds, ele_targets, feat_preds, feat_targets,
         masks, _) = data_extract(model_out, label, self.has_element, self.has_feat)
        if self.has_element and self.has_feat:
            (ib, ip), (jb, jt) = self.matcher(ele_preds, ele_targets, masks)
            e = self._element_loss(ele_preds, ele_targets, ib, ip, jb, jt)
            f = self._feat_loss(feat_preds, feat_targets, ib, ip, jb, jt)
            return self.mu * e + (1.0 - self.mu) * f
        elif self.has_element:
            (ib, ip), (jb, jt) = self.matcher(ele_preds, ele_targets, masks)
            return self._element_loss(ele_preds, ele_targets, ib, ip, jb, jt)
        else:
            (ib, ip), (jb, jt) = self.matcher(feat_preds, feat_targets, masks)
            return self._feat_loss(feat_preds, feat_targets, ib, ip, jb, jt)


# ----------------------------------------------------------------------------
# Demo
# ----------------------------------------------------------------------------
if __name__ == "__main__":
    B, N, D, Df = 2, 8, 32, 16   # batch, set size, #element classes, feature dim
    key = jax.random.PRNGKey(0)
    k1, k2, k3, k4 = jax.random.split(key, 4)
    ele_preds = jax.random.normal(k1, (B, N, D), dtype=jnp.float32)       # logits
    ele_targets = jax.random.randint(k2, (B, N), 0, D, dtype=jnp.int32)   # class ids
    feat_preds = jax.random.normal(k3, (B, N, Df), dtype=jnp.float32)
    feat_targets = jax.random.normal(k4, (B, N, Df), dtype=jnp.float32)
    masks = jnp.array([[True] * N, [True] * (N - 2) + [False] * 2])       # valid targets
    cls_label = jnp.zeros((B,), dtype=jnp.int32)                          # unused by Loss

    # element-only (exercises NLL cost kernel + CE-mean kernel)
    loss_e = Loss(has_element=True, has_feat=False, mu=0.5, epsilon=0.1)(
        ele_preds, (ele_targets, masks, cls_label))
    # element + feature (adds MSE-mean kernel)
    loss_ef = Loss(has_element=True, has_feat=True, mu=0.5, epsilon=0.1)(
        (ele_preds, feat_preds), (ele_targets, feat_targets, masks, cls_label))
    # feature-only (exercises MSE row-cost kernel)
    loss_f = Loss(has_element=False, has_feat=True, mu=0.5, epsilon=0.1)(
        feat_preds, (feat_targets, masks, cls_label))

    for v in (loss_e, loss_ef, loss_f):
        jax.block_until_ready(v)
        assert bool(jnp.isfinite(v))
    print("KERNEL_OK")
</pallas_src>

<mosaic_0001>
module attributes {stable_mosaic.version = 11 : i64} {
  func.func @_ls_nll_cost_kernel(%arg0: i32, %arg1: memref<1x8x32xf32, #tpu.memory_space<vmem>>, %arg2: memref<1x128x1xi32, #tpu.memory_space<vmem>>, %arg3: memref<1x8x128xf32, #tpu.memory_space<vmem>>) attributes {dimension_semantics = [#tpu.dimension_semantics<parallel>], iteration_bounds = array<i64: 2>, scalar_prefetch = 0 : i64, scratch_operands = 0 : i64, tpu.core_type = #tpu.core_type<tc>, window_params = [{transform_indices = @transform_0, window_bounds = array<i64: 1, 8, 32>}, {transform_indices = @transform_1, window_bounds = array<i64: 1, 128, 1>}, {transform_indices = @transform_2, window_bounds = array<i64: 1, 8, 128>}]} {
    %c0 = arith.constant 0 : index
    %c0_0 = arith.constant 0 : index
    %c0_1 = arith.constant 0 : index
    %0 = vector.load %arg1[%c0, %c0_0, %c0_1] : memref<1x8x32xf32, #tpu.memory_space<vmem>>, vector<1x8x32xf32>
    %cst = arith.constant dense<0xFF800000> : vector<1x8xf32>
    %1 = vector.multi_reduction <maximumf>, %0, %cst [2] : vector<1x8x32xf32> to vector<1x8xf32>
    %2 = vector.shape_cast %1 : vector<1x8xf32> to vector<1x8x1xf32>
    %3 = vector.broadcast %2 : vector<1x8x1xf32> to vector<1x8x32xf32>
    %4 = arith.subf %0, %3 : vector<1x8x32xf32>
    %5 = math.exp %4 : vector<1x8x32xf32>
    %cst_2 = arith.constant dense<0.000000e+00> : vector<1x8xf32>
    %6 = vector.multi_reduction <add>, %5, %cst_2 [2] : vector<1x8x32xf32> to vector<1x8xf32>
    %7 = vector.shape_cast %6 : vector<1x8xf32> to vector<1x8x1xf32>
    %8 = math.log %7 : vector<1x8x1xf32>
    %9 = arith.addf %8, %2 : vector<1x8x1xf32>
    %c0_3 = arith.constant 0 : index
    %c0_4 = arith.constant 0 : index
    %c0_5 = arith.constant 0 : index
    %10 = vector.load %arg2[%c0_3, %c0_4, %c0_5] : memref<1x128x1xi32, #tpu.memory_space<vmem>>, vector<1x128x1xi32>
    %11 = tpu.iota {dimensions = array<i32: 2>} : vector<1x128x32xi32>
    %12 = vector.broadcast %10 : vector<1x128x1xi32> to vector<1x128x32xi32>
    %13 = arith.cmpi eq, %12, %11 : vector<1x128x32xi32>
    %14 = arith.truncf %0 : vector<1x8x32xf32> to vector<1x8x32xbf16>
    %15 = arith.extui %13 : vector<1x128x32xi1> to vector<1x128x32xi32>
    %16 = arith.sitofp %15 : vector<1x128x32xi32> to vector<1x128x32xf32>
    %17 = arith.truncf %16 : vector<1x128x32xf32> to vector<1x128x32xbf16>
    "tpu.trace_start"() <{level = 10 : i32, message = "bnd,bjd->bnj"}> : () -> ()
    %cst_6 = arith.constant dense<0.000000e+00> : vector<1x8x128xf32>
    %18 = tpu.matmul %14, %17, %cst_6 {dimension_numbers = #tpu.dot_dimension_numbers<[2], [2], [1], [1], [0, 0, 0, 1, 1, 1], [0], [0]>} : vector<1x8x32xbf16>, vector<1x128x32xbf16>, vector<1x8x128xf32> -> vector<1x8x128xf32>
    "tpu.trace_stop"() : () -> ()
    %19 = vector.broadcast %9 : vector<1x8x1xf32> to vector<1x8x128xf32>
    %20 = arith.subf %19, %18 : vector<1x8x128xf32>
    %c0_7 = arith.constant 0 : index
    %c0_8 = arith.constant 0 : index
    %c0_9 = arith.constant 0 : index
    %21 = vector.load %arg3[%c0_7, %c0_8, %c0_9] : memref<1x8x128xf32, #tpu.memory_space<vmem>>, vector<1x8x128xf32>
    tpu.vector_store %arg3[%c0_7, %c0_8, %c0_9], %20 {strides = array<i32>} : memref<1x8x128xf32, #tpu.memory_space<vmem>>, vector<1x8x128xf32>,
    return
  }
  func.func @transform_0(%arg0: i32) -> (i32, i32, i32) {
    %c0_i32 = arith.constant 0 : i32
    %c0_i32_0 = arith.constant 0 : i32
    %c0_i32_1 = arith.constant 0 : i32
    return %arg0, %c0_i32, %c0_i32_0 : i32, i32, i32
  }
  func.func @transform_1(%arg0: i32) -> (i32, i32, i32) {
    %c0_i32 = arith.constant 0 : i32
    %c0_i32_0 = arith.constant 0 : i32
    %c0_i32_1 = arith.constant 0 : i32
    return %arg0, %c0_i32, %c0_i32_0 : i32, i32, i32
  }
  func.func @transform_2(%arg0: i32) -> (i32, i32, i32) {
    %c0_i32 = arith.constant 0 : i32
    %c0_i32_0 = arith.constant 0 : i32
    %c0_i32_1 = arith.constant 0 : i32
    return %arg0, %c0_i32, %c0_i32_0 : i32, i32, i32
  }
}

</mosaic_0001>

<llo_original>
// kernel: f.1
$region0: #{f.1}
  #allocation0 [shape = 'u32[]', space=smem, size = 0x4, offset = 0x4, fixed_abs, tag = 'smem constant byte address 0x4 - core index']
  #allocation1 [shape = 'u32[72,128]{1,0:T(1,128)}', space=vmem, size = 0x9000, scoped, tag = 'internal scratch']
  %s0 = inlined_call_operand.vmem [shape: f32[2,8,32], index: 0, kind: input, shape index: {}]
  %s1 = inlined_call_operand.vmem [shape: s32[2,128,1], index: 1, kind: input, shape index: {}]
  %s2 = inlined_call_operand.hbm [shape: f32[2,8,128], index: 2, kind: output, shape index: {}]
  %s3 = sld [smem:[#allocation0]]
  $region41: #{f.1} parent=0
    _
  %s5 = ssub.s32 1, %s3
  %s6 = scalar_select 0, %s5, %s3
  $region1: #{f.1} parent=0
    #allocation2 [shape = 'u8[8192]{0}', space=vmem, size = 0x2000, scoped, tag = 'output window, operand 0']
    #allocation3 [shape = 's32[2]{0}', space=sflag, size = 0x8, scoped, tag = 'scoped memory for f.1']
    %7 = vsyncpa [#allocation3], 0
    %s8 = scalar_lea.sflag [#allocation3], 1
    %9 = vsyncpa %s8, 0
    loop: start=0, step=1, limit=4
    $region2: #{f.1} parent=1 // loop_pre_header
      _
    $region3: #{f.1} parent=1 // loop_header
      %s11 = sphi 0, %s15
      %p12 = scmp.ge.s32.totalorder %s11, 4
      %s21 = sphi 0, %s23
      %s24 = sphi 0, %s21
      %s25 = sphi 0, %s24
      %s41 = sphi 0, %s25
      %s47 = sphi 0, %s49
      %s50 = sphi 0, %s47
      %s51 = sphi 0, %s50
      %s67 = sphi 0, %s51
      %s73 = sphi 0, %s75
      %s76 = sphi 0, %s73
      %s77 = sphi 0, %s76
      %s93 = sphi 0, %s77
    $region4: #{f.1} parent=1 // loop_header_branch
      %14 = sbr.rel (%p12) target = $region8
    $region5: #{f.1} parent=1 // loop_body
      %s16 = ssub.s32 %s11, 1
      %s17 = ssub.s32 %s11, 2
      %s18 = sadd.s32 %s11, 1
      %s19 = ssub.s32 %s11, %s18
      %p20 = scmp.eq.s32.totalorder %s19, 0
      %s22 = sadd.s32 %s21, 1
      %s23 = scalar_select %p20, %s21, %s22
      %p26 = pneg %p20
      %p27 = scmp.eq.s32.totalorder %s11, 1
      %p28 = por %p26, %p27
      %p29 = scmp.ne.s32.totalorder %s21, %s24
      %p30 = scmp.eq.s32.totalorder %s11, 0
      %p31 = por %p29, %p30
      %p32 = scmp.ne.s32.totalorder %s21, %s24
      %p33 = scmp.eq.s32.totalorder %s16, 1
      %p34 = por %p32, %p33
      %p35 = scmp.ne.s32.totalorder %s24, %s25
      %p36 = scmp.eq.s32.totalorder %s16, 0
      %p37 = por %p35, %p36
      %p38 = scmp.ne.s32.totalorder %s24, %s25
      %p39 = scmp.eq.s32.totalorder %s17, 1
      %p40 = por %p38, %p39
      %p42 = scmp.ne.s32.totalorder %s25, %s41
      %p43 = scmp.eq.s32.totalorder %s17, 0
      %p44 = por %p42, %p43
      %s45 = ssub.s32 %s11, %s18
      %p46 = scmp.eq.s32.totalorder %s45, 0
      %s48 = sadd.s32 %s47, 1
      %s49 = scalar_select %p46, %s47, %s48
      %p52 = pneg %p46
      %p53 = scmp.eq.s32.totalorder %s11, 1
      %p54 = por %p52, %p53
      %p55 = scmp.ne.s32.totalorder %s47, %s50
      %p56 = scmp.eq.s32.totalorder %s11, 0
      %p57 = por %p55, %p56
      %p58 = scmp.ne.s32.totalorder %s47, %s50
      %p59 = scmp.eq.s32.totalorder %s16, 1
      %p60 = por %p58, %p59
      %p61 = scmp.ne.s32.totalorder %s50, %s51
      %p62 = scmp.eq.s32.totalorder %s16, 0
      %p63 = por %p61, %p62
      %p64 = scmp.ne.s32.totalorder %s50, %s51
      %p65 = scmp.eq.s32.totalorder %s17, 1
      %p66 = por %p64, %p65
      %p68 = scmp.ne.s32.totalorder %s51, %s67
      %p69 = scmp.eq.s32.totalorder %s17, 0
      %p70 = por %p68, %p69
      %s71 = ssub.s32 %s11, %s18
      %p72 = scmp.eq.s32.totalorder %s71, 0
      %s74 = sadd.s32 %s73, 1
      %s75 = scalar_select %p72, %s73, %s74
      %p78 = pneg %p72
      %p79 = scmp.eq.s32.totalorder %s11, 1
      %p80 = por %p78, %p79
      %p81 = scmp.ne.s32.totalorder %s73, %s76
      %p82 = scmp.eq.s32.totalorder %s11, 0
      %p83 = por %p81, %p82
      %p84 = scmp.ne.s32.totalorder %s73, %s76
      %p85 = scmp.eq.s32.totalorder %s16, 1
      %p86 = por %p84, %p85
      %p87 = scmp.ne.s32.totalorder %s76, %s77
      %p88 = scmp.eq.s32.totalorder %s16, 0
      %p89 = por %p87, %p88
      %p90 = scmp.ne.s32.totalorder %s76, %s77
      %p91 = scmp.eq.s32.totalorder %s17, 1
      %p92 = por %p90, %p91
      %p94 = scmp.ne.s32.totalorder %s77, %s93
      %p95 = scmp.eq.s32.totalorder %s17, 0
      %p96 = por %p94, %p95
      %p97 = scmp.le.s32.totalorder 1, %s11
      %p98 = scmp.lt.s32.totalorder %s11, 3
      %p99 = pnand %p97, %p98
      %p100 = pneg %p99
      // Predicated region
      $region9: #{f.1} parent=5 // pred_check
        _
      $region10: #{f.1} parent=5 // pred_check_branch
        %102 = sbr.rel (%p99) target = $region12
      $region11: #{f.1} parent=5 // pred_region
        %s103 = ssub.s32 %s11, 1
      $region12: #{f.1} parent=5 // pred_fallthru
        _
      %p104 = scmp.lt.s32.totalorder %s11, 2
      // Predicated region
      $region13: #{f.1} parent=5 // pred_check
        %p105 = pneg %p104
      $region14: #{f.1} parent=5 // pred_check_branch
        %107 = sbr.rel (%p105) target = $region16
      $region15: #{f.1} parent=5 // pred_region
        // Predicated region
        $region17: #{f.1} parent=15 // pred_check
          %p108 = pneg %p31
        $region18: #{f.1} parent=15 // pred_check_branch
          %110 = sbr.rel (%p108) target = $region20
        $region19: #{f.1} parent=15 // pred_region
          %p111 = scmp.lt.s32.totalorder %s11, 1
          %s112 = scalar_select %p111, %s11, 1
          %s113 = smul.addr %s112, 8
          %s114 = scalar_lea.vmem %s0, %s113
        $region20: #{f.1} parent=15 // pred_fallthru
          _
        // Predicated region
        $region21: #{f.1} parent=15 // pred_check
          %p115 = pneg %p57
        $region22: #{f.1} parent=15 // pred_check_branch
          %117 = sbr.rel (%p115) target = $region24
        $region23: #{f.1} parent=15 // pred_region
          %p118 = scmp.lt.s32.totalorder %s11, 1
          %s119 = scalar_select %p118, %s11, 1
          %s120 = smul.addr %s119, 16
          %s121 = smul.addr %s120, 8
          %s122 = scalar_lea.vmem %s1, %s121
        $region24: #{f.1} parent=15 // pred_fallthru
          _
      $region16: #{f.1} parent=5 // pred_fallthru
        _
      %p123 = scmp.le.s32.totalorder 1, %s11
      %p124 = scmp.lt.s32.totalorder %s11, 3
      %p125 = pnand %p123, %p124
      %p126 = pneg %p125
      // Predicated region
      $region25: #{f.1} parent=5 // pred_check
        _
      $region26: #{f.1} parent=5 // pred_check_branch
        %128 = sbr.rel (%p125) target = $region28
      $region27: #{f.1} parent=5 // pred_region
        %s129 = ssub.s32 %s11, 1
        %p130 = scmp.lt.s32.totalorder %s16, 1
        %s131 = scalar_select %p130, %s16, 1
        %s132 = smul.addr %s131, 8
        %s133 = scalar_lea.vmem %s0, %s132
        %p134 = pneg %p37
        %p135 = pneg %p34
        %p136 = scmp.lt.s32.totalorder %s16, 1
        %s137 = scalar_select %p136, %s16, 1
        %s138 = smul.addr %s137, 16
        %s139 = smul.addr %s138, 8
        %s140 = scalar_lea.vmem %s1, %s139
        %p141 = pneg %p63
        %p142 = pneg %p60
        %p143 = pneg %p89
        %p144 = pneg %p86
        %s145 = sand.u32 %s76, 1
        %s146 = scalar_lea.sflag [#allocation3], %s145
        %s147 = sand.u32 %s76, 1
        %s148 = smul.addr %s147, 8
        %s149 = scalar_lea.vmem [#allocation2], %s148
        %p150 = scmp.lt.s32.totalorder %s16, 1
        %s151 = scalar_select %p150, %s16, 1
        %s152 = smul.addr %s151, 8
        %s153 = scalar_lea.vmem %s0, %s152
        %p154 = scmp.lt.s32.totalorder %s16, 1
        %s155 = scalar_select %p154, %s16, 1
        %s156 = smul.addr %s155, 16
        %s157 = smul.addr %s156, 8
        %s158 = scalar_lea.vmem %s1, %s157
        %v159 = vld [vmem:[%s153] sm:$0xff]
        %vm160 = vcmask 261120
        %v161 = vsel %vm160, %v159, -inf
        %162 = vmax.xlane.f32.xlu0 %v161
        %v163 = vpop.xlane.xlu0 %162
        %v164 = vsub.f32 %v159, %v163
        %v165 = vmul.f32 %v164, 1.442695
        %v166 = vpow.pop %v165
        %v167 = vsel %vm160, %v166, 0.0
        %168 = vadd.xlane.f32.xlu0 %v167
        %v169 = vpop.xlane.xlu0 %168
        %v170 = vlog2.pop %v169
        %v171 = vmul.f32 %v170, 0.6931472
        %v172 = vadd.f32 %v171, %v163
        %v173 = vld [vmem:[%s158] sm:$0xff]
        %v174 = vld [vmem:[%s158 + $0x8] sm:$0xff]
        %v175 = vld [vmem:[%s158 + $0x10] sm:$0xff]
        %v176 = vld [vmem:[%s158 + $0x18] sm:$0xff]
        %v177 = vld [vmem:[%s158 + $0x20] sm:$0xff]
        %v178 = vld [vmem:[%s158 + $0x28] sm:$0xff]
        %v179 = vld [vmem:[%s158 + $0x30] sm:$0xff]
        %v180 = vld [vmem:[%s158 + $0x38] sm:$0xff]
        %v181 = vld [vmem:[%s158 + $0x40] sm:$0xff]
        %v182 = vld [vmem:[%s158 + $0x48] sm:$0xff]
        %v183 = vld [vmem:[%s158 + $0x50] sm:$0xff]
        %v184 = vld [vmem:[%s158 + $0x58] sm:$0xff]
        %v185 = vld [vmem:[%s158 + $0x60] sm:$0xff]
        %v186 = vld [vmem:[%s158 + $0x68] sm:$0xff]
        %v187 = vld [vmem:[%s158 + $0x70] sm:$0xff]
        %v188 = vld [vmem:[%s158 + $0x78] sm:$0xff]
        %v189 = vlaneseq
        %v190 = vand.u32 %v189, 127
        %191 = vset.pattern.permute.xlu0 0
        %192 = vperm.xlu0 %191, %v173
        %v193 = vpop.permute.xlu0 %192
        %194 = vset.pattern.permute.xlu0 0
        %195 = vperm.xlu0 %194, %v174
        %v196 = vpop.permute.xlu0 %195
        %197 = vset.pattern.permute.xlu0 0
        %198 = vperm.xlu0 %197, %v175
        %v199 = vpop.permute.xlu0 %198
        %200 = vset.pattern.permute.xlu0 0
        %201 = vperm.xlu0 %200, %v176
        %v202 = vpop.permute.xlu0 %201
        %203 = vset.pattern.permute.xlu0 0
        %204 = vperm.xlu0 %203, %v177
        %v205 = vpop.permute.xlu0 %204
        %206 = vset.pattern.permute.xlu0 0
        %207 = vperm.xlu0 %206, %v178
        %v208 = vpop.permute.xlu0 %207
        %209 = vset.pattern.permute.xlu0 0
        %210 = vperm.xlu0 %209, %v179
        %v211 = vpop.permute.xlu0 %210
        %212 = vset.pattern.permute.xlu0 0
        %213 = vperm.xlu0 %212, %v180
        %v214 = vpop.permute.xlu0 %213
        %215 = vset.pattern.permute.xlu0 0
        %216 = vperm.xlu0 %215, %v181
        %v217 = vpop.permute.xlu0 %216
        %218 = vset.pattern.permute.xlu0 0
        %219 = vperm.xlu0 %218, %v182
        %v220 = vpop.permute.xlu0 %219
        %221 = vset.pattern.permute.xlu0 0
        %222 = vperm.xlu0 %221, %v183
        %v223 = vpop.permute.xlu0 %222
        %224 = vset.pattern.permute.xlu0 0
        %225 = vperm.xlu0 %224, %v184
        %v226 = vpop.permute.xlu0 %225
        %227 = vset.pattern.permute.xlu0 0
        %228 = vperm.xlu0 %227, %v185
        %v229 = vpop.permute.xlu0 %228
        %230 = vset.pattern.permute.xlu0 0
        %231 = vperm.xlu0 %230, %v186
        %v232 = vpop.permute.xlu0 %231
        %233 = vset.pattern.permute.xlu0 0
        %234 = vperm.xlu0 %233, %v187
        %v235 = vpop.permute.xlu0 %234
        %236 = vset.pattern.permute.xlu0 0
        %237 = vperm.xlu0 %236, %v188
        %v238 = vpop.permute.xlu0 %237
        %vm239 = vcmp.eq.s32.totalorder %v193, %v190
        %vm240 = vcmp.eq.s32.totalorder %v196, %v190
        %vm241 = vcmp.eq.s32.totalorder %v199, %v190
        %vm242 = vcmp.eq.s32.totalorder %v202, %v190
        %vm243 = vcmp.eq.s32.totalorder %v205, %v190
        %vm244 = vcmp.eq.s32.totalorder %v208, %v190
        %vm245 = vcmp.eq.s32.totalorder %v211, %v190
        %vm246 = vcmp.eq.s32.totalorder %v214, %v190
        %vm247 = vcmp.eq.s32.totalorder %v217, %v190
        %vm248 = vcmp.eq.s32.totalorder %v220, %v190
        %vm249 = vcmp.eq.s32.totalorder %v223, %v190
        %vm250 = vcmp.eq.s32.totalorder %v226, %v190
        %vm251 = vcmp.eq.s32.totalorder %v229, %v190
        %vm252 = vcmp.eq.s32.totalorder %v232, %v190
        %vm253 = vcmp.eq.s32.totalorder %v235, %v190
        %vm254 = vcmp.eq.s32.totalorder %v238, %v190
        %v255 = vpack.c.bf16 %v159, %v159
        %v256 = vsel %vm239, 1, 0
        %v257 = vsel %vm240, 1, 0
        %v258 = vsel %vm241, 1, 0
        %v259 = vsel %vm242, 1, 0
        %v260 = vsel %vm243, 1, 0
        %v261 = vsel %vm244, 1, 0
        %v262 = vsel %vm245, 1, 0
        %v263 = vsel %vm246, 1, 0
        %v264 = vsel %vm247, 1, 0
        %v265 = vsel %vm248, 1, 0
        %v266 = vsel %vm249, 1, 0
        %v267 = vsel %vm250, 1, 0
        %v268 = vsel %vm251, 1, 0
        %v269 = vsel %vm252, 1, 0
        %v270 = vsel %vm253, 1, 0
        %v271 = vsel %vm254, 1, 0
        %v272 = vcvt.s32.f32 %v256
        %v273 = vcvt.s32.f32 %v257
        %v274 = vcvt.s32.f32 %v258
        %v275 = vcvt.s32.f32 %v259
        %v276 = vcvt.s32.f32 %v260
        %v277 = vcvt.s32.f32 %v261
        %v278 = vcvt.s32.f32 %v262
        %v279 = vcvt.s32.f32 %v263
        %v280 = vcvt.s32.f32 %v264
        %v281 = vcvt.s32.f32 %v265
        %v282 = vcvt.s32.f32 %v266
        %v283 = vcvt.s32.f32 %v267
        %v284 = vcvt.s32.f32 %v268
        %v285 = vcvt.s32.f32 %v269
        %v286 = vcvt.s32.f32 %v270
        %v287 = vcvt.s32.f32 %v271
        %v288 = vpack.c.bf16 %v272, %v272
        %v289 = vpack.c.bf16 %v273, %v273
        %v290 = vpack.c.bf16 %v274, %v274
        %v291 = vpack.c.bf16 %v275, %v275
        %v292 = vpack.c.bf16 %v276, %v276
        %v293 = vpack.c.bf16 %v277, %v277
        %v294 = vpack.c.bf16 %v278, %v278
        %v295 = vpack.c.bf16 %v279, %v279
        %v296 = vpack.c.bf16 %v280, %v280
        %v297 = vpack.c.bf16 %v281, %v281
        %v298 = vpack.c.bf16 %v282, %v282
        %v299 = vpack.c.bf16 %v283, %v283
        %v300 = vpack.c.bf16 %v284, %v284
        %v301 = vpack.c.bf16 %v285, %v285
        %v302 = vpack.c.bf16 %v286, %v286
        %v303 = vpack.c.bf16 %v287, %v287
        %v320 = vunpack.c.l.b16 %v288
        %v321 = vunpack.c.l.b16 %v289
        %v322 = vunpack.c.l.b16 %v290
        %v323 = vunpack.c.l.b16 %v291
        %v324 = vunpack.c.l.b16 %v292
        %v325 = vunpack.c.l.b16 %v293
        %v326 = vunpack.c.l.b16 %v294
        %v327 = vunpack.c.l.b16 %v295
        %v328 = vunpack.c.l.b16 %v296
        %v329 = vunpack.c.l.b16 %v297
        %v330 = vunpack.c.l.b16 %v298
        %v331 = vunpack.c.l.b16 %v299
        %v332 = vunpack.c.l.b16 %v300
        %v333 = vunpack.c.l.b16 %v301
        %v334 = vunpack.c.l.b16 %v302
        %v335 = vunpack.c.l.b16 %v303
        %v336 = vpack.c.b16 %v321, %v320
        %v337 = vpack.c.b16 %v323, %v322
        %v338 = vpack.c.b16 %v325, %v324
        %v339 = vpack.c.b16 %v327, %v326
        %v340 = vpack.c.b16 %v329, %v328
        %v341 = vpack.c.b16 %v331, %v330
        %v342 = vpack.c.b16 %v333, %v332
        %v343 = vpack.c.b16 %v335, %v334
        %v345 = vsel %vm160, %v255, 0
        %v348 = vsel %vm160, %v336, 0
        %v351 = vsel %vm160, %v337, 0
        %v354 = vsel %vm160, %v338, 0
        %v357 = vsel %vm160, %v339, 0
        %v360 = vsel %vm160, %v340, 0
        %v363 = vsel %vm160, %v341, 0
        %v366 = vsel %vm160, %v342, 0
        %v369 = vsel %vm160, %v343, 0
        %371 = vmatpush.bf16.xpose.msra.mxu0 %v369
        %372 = vmatpush.bf16.xpose.msra.mxu0 %v366
        %373 = vmatpush.bf16.xpose.msra.mxu0 %v363
        %374 = vmatpush.bf16.xpose.msra.mxu0 %v360
        %375 = vmatpush.bf16.xpose.msra.mxu0 %v357
        %376 = vmatpush.bf16.xpose.msra.mxu0 %v354
        %377 = vmatpush.bf16.xpose.msra.mxu0 %v351
        %378 = vmatpush.bf16.xpose.msra.mxu0 %v348
        %379 = vmatmul.bf16.gmra.mxu0 %v345
        %v380 = vpop.f32.mrf.mxu0
        %v381 = vadd.f32 0.0, %v380
        %v382 = vpop.f32.mrf.mxu0
        %383 = vdwg.mxu0
        %v384 = vsub.f32 %v172, %v381
        %385 = vst [vmem:[%s149] sm:$0xff] %v384
        %s386 = sand.u32 %s76, 1
        %s387 = scalar_lea.sflag [#allocation3], %s386
        %s388 = sand.u32 %s76, 1
        %s389 = smul.addr %s388, 8
        %s390 = scalar_lea.vmem [#allocation2], %s389
        // Predicated region
        $region29: #{f.1} parent=27 // pred_check
          %p391 = pneg %p86
        $region30: #{f.1} parent=27 // pred_check_branch
          %393 = sbr.rel (%p391) target = $region32
        $region31: #{f.1} parent=27 // pred_region
          %395 = vsyncadd %s387, 0
          %s396 = smul.addr %s16, 8
          %s397 = scalar_lea.hbm %s2, %s396
          %s399 = sshll.u32 %s390, 4
          %s400 = int_to_ptr.vmem [resolvable:$true] %s399
          %s401 = sshll.u32 %s397, 4
          %s402 = int_to_ptr.hbm [resolvable:$true] %s401
          %404 = dma.vmem_to_hbm [thread:$0]  %s400, 128, %s402, %s387
        $region32: #{f.1} parent=27 // pred_fallthru
          _
      $region28: #{f.1} parent=5 // pred_fallthru
        _
      %p405 = scmp.le.s32.totalorder 2, %s11
      // Predicated region
      $region33: #{f.1} parent=5 // pred_check
        %p406 = pneg %p405
      $region34: #{f.1} parent=5 // pred_check_branch
        %408 = sbr.rel (%p406) target = $region36
      $region35: #{f.1} parent=5 // pred_region
        %s409 = ssub.s32 %s11, 2
        // Predicated region
        $region37: #{f.1} parent=35 // pred_check
          %p410 = pneg %p92
        $region38: #{f.1} parent=35 // pred_check_branch
          %412 = sbr.rel (%p410) target = $region40
        $region39: #{f.1} parent=35 // pred_region
          %s413 = sand.u32 %s77, 1
          %s414 = scalar_lea.sflag [#allocation3], %s413
          %s415 = sand.u32 %s77, 1
          %s416 = smul.addr %s415, 8
          %s417 = scalar_lea.vmem [#allocation2], %s416
          %419 = dma.done %s414, 128
        $region40: #{f.1} parent=35 // pred_fallthru
          _
      $region36: #{f.1} parent=5 // pred_fallthru
        _
    $region6: #{f.1} parent=1 // loop_footer
      %s15 = sadd.s32 1, %s11
    $region7: #{f.1} parent=1 // loop_footer_branch
      %10 = sbr.rel target = $region3
    $region8: #{f.1} parent=1 // loop_exit
      _
    %420 = vsyncpa [#allocation3], 1
    %s421 = scalar_lea.sflag [#allocation3], 1
    %422 = vsyncpa %s421, 1

</llo_original>
